<compile_context>
chip_gen: v7x
topology: tpu7x:2x2x1
jax: 0.10.0
libtpu: 0.0.40
codegen_flags: <defaults>
</compile_context>

<pallas_src>
import jax
import jax.numpy as jnp
from jax.experimental import pallas as pl
from jax.experimental.pallas import tpu as pltpu


def _round_up(x, m):
    return ((x + m - 1) // m) * m


def _vmem_bytes(tm, tnk, itemsize):
    """Double-buffered x, W, bias, output + the f32 accumulator."""
    return (2 * (tm * tnk + tnk * tnk + tnk) * itemsize   # x, W, b (x2 buffers)
            + 2 * tm * tnk * itemsize                      # output (x2 buffers)
            + tm * tnk * 4)                                # f32 accumulator


def _residual_linear_kernel(x_ref, w_ref, b_ref, o_ref, acc_ref):
    """One (i, j, k) grid step of out = x @ W + b + x  (requires tn == tk).

    x_ref  : (TM, TK)  x tile (i, k) -> MXU; doubles as the residual tile
                       when k == j (tn == tk is enforced by the wrapper).
    w_ref  : (TK, TN)  weight tile (k, j)
    b_ref  : (1,  TN)  bias tile (j)
    o_ref  : (TM, TN)  output tile (i, j)
    acc_ref: (TM, TN)  f32 VMEM accumulator, resident across the K axis
    """
    j = pl.program_id(1)
    k = pl.program_id(2)

    @pl.when(k == 0)
    def _init():
        # Bias folded into accumulator init: no zero-fill, no epilogue add.
        acc_ref[...] = jnp.broadcast_to(
            b_ref[...].astype(jnp.float32), acc_ref.shape)

    acc_ref[...] += jnp.dot(x_ref[...], w_ref[...],
                            preferred_element_type=jnp.float32)

    @pl.when(k == j)
    def _residual():
        # With tn == tk, the (i, k == j) x tile IS the (i, j) residual tile:
        # the residual add costs zero extra HBM traffic.
        acc_ref[...] += x_ref[...].astype(jnp.float32)

    @pl.when(k == pl.num_programs(2) - 1)
    def _finalize():
        o_ref[...] = acc_ref[...].astype(o_ref.dtype)


def residual_linear(x, w, b, *, tm=None, tnk=None):
    """Residual(Linear(D, D)):  out = x @ W + b + x, fused in one Pallas kernel.

    x: (B, S, D), w: (D, D), b: (D,).  tm / tnk may be forced for testing;
    tnk is used for BOTH the N and K tile (tn == tk), as required by the
    in-K residual fold.
    """
    B, S, D = x.shape
    M = B * S
    dtype = x.dtype
    itemsize = jnp.dtype(dtype).itemsize

    Dp = _round_up(D, 128)

    # --- per-generation VMEM budget (v7x: 64 MiB/TC, v5e/v6e: 128 MiB) ------
    try:
        phys_vmem = int(pltpu.get_tpu_info().vmem_capacity_bytes)
    except Exception:
        phys_vmem = 64 * 1024 * 1024          # conservative (v7x per-TC) fallback
    budget = min((phys_vmem * 3) // 4, 100 * 1024 * 1024)

    # --- N/K tile: tn == tk, as large as Dp allows.  The x (i,k) tile is
    #     re-fetched Dp/tn times and the W (k,j) tile Mp/tm times, so large
    #     tn/tm directly cut HBM traffic on this memory-bound op. -----------
    if tnk is None:
        if Dp <= 1024:
            tnk = Dp                           # single N/K block: no re-reads
        else:
            tnk = 128
            t = 256
            while t <= 1024:
                if Dp % t == 0:
                    tnk = t
                t *= 2
    assert tnk % 128 == 0 and Dp % tnk == 0

    # --- M tile: large for pipeline efficiency (0.35 us/step overhead),
    #     chosen to keep row padding small and the working set in budget. ---
    if tm is None:
        if M <= 1024:
            tm = _round_up(M, 8)
        else:
            tm = min((1024, 512, 256, 128),
                     key=lambda t: (_round_up(M, t) - M, -t))
    assert tm % 8 == 0
    while (_vmem_bytes(tm, tnk, itemsize) > (budget * 3) // 4
           and tm % 16 == 0 and tm > 128):
        tm //= 2
    Mp = _round_up(M, tm)

    # v7x has 2 TensorCores: expose >= 2 blocks on the parallel axes when
    # there is enough work to split (no cost on single-TC v5e/v6e).
    if Mp // tm == 1 and Dp // tnk == 1 and tm % 16 == 0 and tm >= 256:
        tm //= 2
        Mp = _round_up(M, tm)

    # --- operands: pad ONLY if not already tile-aligned (jnp.pad would
    #     otherwise materialize a full extra HBM copy of x / W). -------------
    x2 = x.reshape(M, D)
    if Mp != M or Dp != D:
        x2 = jnp.pad(x2, ((0, Mp - M), (0, Dp - D)))
    wp = w if Dp == D else jnp.pad(w, ((0, Dp - D), (0, Dp - D)))
    b2 = b.reshape(1, D)
    if Dp != D:
        b2 = jnp.pad(b2, ((0, 0), (0, Dp - D)))

    grid = (Mp // tm, Dp // tnk, Dp // tnk)

    vmem_est = _vmem_bytes(tm, tnk, itemsize)
    vmem_limit = int(min(budget, max(2 * vmem_est, 32 * 1024 * 1024)))

    cost = pl.CostEstimate(
        flops=2 * M * D * D + 2 * M * D,              # GEMM + bias/residual adds
        transcendentals=0,
        bytes_accessed=(2 * M * D + D * D + D) * itemsize,   # x once, out, W, b
    )

    out_p = pl.pallas_call(
        _residual_linear_kernel,
        out_shape=jax.ShapeDtypeStruct((Mp, Dp), dtype),
        grid_spec=pltpu.PrefetchScalarGridSpec(
            num_scalar_prefetch=0,
            grid=grid,
            in_specs=[
                pl.BlockSpec((tm, tnk), lambda i, j, k: (i, k)),    # x (MXU + residual)
                pl.BlockSpec((tnk, tnk), lambda i, j, k: (k, j)),   # W
                pl.BlockSpec((1, tnk), lambda i, j, k: (0, j)),     # bias
            ],
            out_specs=pl.BlockSpec((tm, tnk), lambda i, j, k: (i, j)),
            scratch_shapes=[pltpu.VMEM((tm, tnk), jnp.float32)],
        ),
        compiler_params=pltpu.CompilerParams(
            dimension_semantics=("parallel", "parallel", "arbitrary"),
            vmem_limit_bytes=vmem_limit,
        ),
        cost_estimate=cost,
    )(x2, wp, b2)

    return out_p[:M, :D].reshape(B, S, D)


def reference(x, w, b):
    return jnp.einsum("bsd,de->bse", x, w) + b[None, None, :] + x


if __name__ == "__main__":
    key = jax.random.PRNGKey(0)
    kx, kw, kb, kx2, kw2, kb2 = jax.random.split(key, 6)

    # Small shape consistent with the module: batch=2, seq=8, hidden=32.
    B, S, D = 2, 8, 32
    x = jax.random.normal(kx, (B, S, D), dtype=jnp.float32)
    w = jax.random.normal(kw, (D, D), dtype=jnp.float32) * (1.0 / D ** 0.5)
    b = jax.random.normal(kb, (D,), dtype=jnp.float32) * 0.01

    out = jax.block_until_ready(residual_linear(x, w, b))
    ref = reference(x, w, b)
    assert out.shape == (B, S, D)
    assert jnp.allclose(out, ref, atol=1e-5, rtol=1e-5), "mismatch (small shape)"

    # Second shape forcing a multi-block (i, j, k) grid: exercises the k == j
    # residual fold, the per-(i, j) bias init, and M-row padding.
    B2, S2, D2 = 2, 20, 256
    x_b = jax.random.normal(kx2, (B2, S2, D2), dtype=jnp.float32)
    w_b = jax.random.normal(kw2, (D2, D2), dtype=jnp.float32) * (1.0 / D2 ** 0.5)
    b_b = jax.random.normal(kb2, (D2,), dtype=jnp.float32) * 0.01

    out_b = jax.block_until_ready(residual_linear(x_b, w_b, b_b, tm=32, tnk=128))
    ref_b = reference(x_b, w_b, b_b)
    assert out_b.shape == (B2, S2, D2)
    assert jnp.allclose(out_b, ref_b, atol=1e-4, rtol=1e-4), "mismatch (tiled shape)"

    print("KERNEL_OK")
</pallas_src>

<mosaic_0001>
module attributes {stable_mosaic.version = 11 : i64} {
  func.func @_residual_linear_kernel(%arg0: i32, %arg1: i32, %arg2: i32, %arg3: memref<16x128xf32, #tpu.memory_space<vmem>>, %arg4: memref<128x128xf32, #tpu.memory_space<vmem>>, %arg5: memref<1x128xf32, #tpu.memory_space<vmem>>, %arg6: memref<16x128xf32, #tpu.memory_space<vmem>>, %arg7: memref<16x128xf32, #tpu.memory_space<vmem>>) attributes {dimension_semantics = [#tpu.dimension_semantics<parallel>, #tpu.dimension_semantics<parallel>, #tpu.dimension_semantics<arbitrary>], iteration_bounds = array<i64: 1, 1, 1>, scalar_prefetch = 0 : i64, scratch_operands = 1 : i64, tpu.core_type = #tpu.core_type<tc>, window_params = [{transform_indices = @transform_0, window_bounds = array<i64: 16, 128>}, {transform_indices = @transform_1, window_bounds = array<i64: 128, 128>}, {transform_indices = @transform_2, window_bounds = array<i64: 1, 128>}, {transform_indices = @transform_3, window_bounds = array<i64: 16, 128>}]} {
    %c0_i32 = arith.constant 0 : i32
    %0 = arith.cmpi eq, %arg2, %c0_i32 : i32
    %1 = arith.extui %0 : i1 to i32
    %c0_i32_0 = arith.constant 0 : i32
    %2 = arith.cmpi ne, %1, %c0_i32_0 : i32
    scf.if %2 {
      %c0_11 = arith.constant 0 : index
      %c0_12 = arith.constant 0 : index
      %15 = vector.load %arg5[%c0_11, %c0_12] : memref<1x128xf32, #tpu.memory_space<vmem>>, vector<1x128xf32>
      %16 = vector.shape_cast %15 : vector<1x128xf32> to vector<1x128xf32>
      %17 = vector.broadcast %16 : vector<1x128xf32> to vector<16x128xf32>
      %c0_13 = arith.constant 0 : index
      %c0_14 = arith.constant 0 : index
      %18 = vector.load %arg7[%c0_13, %c0_14] : memref<16x128xf32, #tpu.memory_space<vmem>>, vector<16x128xf32>
      tpu.vector_store %arg7[%c0_13, %c0_14], %17 {strides = array<i32>} : memref<16x128xf32, #tpu.memory_space<vmem>>, vector<16x128xf32>,
    } else {
    }
    %c0 = arith.constant 0 : index
    %c0_1 = arith.constant 0 : index
    %3 = vector.load %arg7[%c0, %c0_1] : memref<16x128xf32, #tpu.memory_space<vmem>>, vector<16x128xf32>
    %c0_2 = arith.constant 0 : index
    %c0_3 = arith.constant 0 : index
    %4 = vector.load %arg3[%c0_2, %c0_3] : memref<16x128xf32, #tpu.memory_space<vmem>>, vector<16x128xf32>
    %c0_4 = arith.constant 0 : index
    %c0_5 = arith.constant 0 : index
    %5 = vector.load %arg4[%c0_4, %c0_5] : memref<128x128xf32, #tpu.memory_space<vmem>>, vector<128x128xf32>
    %cst = arith.constant dense<0.000000e+00> : vector<16x128xf32>
    %6 = tpu.matmul %4, %5, %cst {dimension_numbers = #tpu.dot_dimension_numbers<[1], [0], [0], [1], [0, 0, 1, 1], [], []>} : vector<16x128xf32>, vector<128x128xf32>, vector<16x128xf32> -> vector<16x128xf32>
    %7 = arith.addf %3, %6 : vector<16x128xf32>
    %c0_6 = arith.constant 0 : index
    %c0_7 = arith.constant 0 : index
    %8 = vector.load %arg7[%c0_6, %c0_7] : memref<16x128xf32, #tpu.memory_space<vmem>>, vector<16x128xf32>
    tpu.vector_store %arg7[%c0_6, %c0_7], %7 {strides = array<i32>} : memref<16x128xf32, #tpu.memory_space<vmem>>, vector<16x128xf32>,
    %9 = arith.cmpi eq, %arg2, %arg1 : i32
    %10 = arith.extui %9 : i1 to i32
    %c0_i32_8 = arith.constant 0 : i32
    %11 = arith.cmpi ne, %10, %c0_i32_8 : i32
    scf.if %11 {
      %c0_11 = arith.constant 0 : index
      %c0_12 = arith.constant 0 : index
      %15 = vector.load %arg7[%c0_11, %c0_12] : memref<16x128xf32, #tpu.memory_space<vmem>>, vector<16x128xf32>
      %c0_13 = arith.constant 0 : index
      %c0_14 = arith.constant 0 : index
      %16 = vector.load %arg3[%c0_13, %c0_14] : memref<16x128xf32, #tpu.memory_space<vmem>>, vector<16x128xf32>
      %17 = arith.addf %15, %16 : vector<16x128xf32>
      %c0_15 = arith.constant 0 : index
      %c0_16 = arith.constant 0 : index
      %18 = vector.load %arg7[%c0_15, %c0_16] : memref<16x128xf32, #tpu.memory_space<vmem>>, vector<16x128xf32>
      tpu.vector_store %arg7[%c0_15, %c0_16], %17 {strides = array<i32>} : memref<16x128xf32, #tpu.memory_space<vmem>>, vector<16x128xf32>,
    } else {
    }
    %c0_i32_9 = arith.constant 0 : i32
    %12 = arith.cmpi eq, %arg2, %c0_i32_9 : i32
    %13 = arith.extui %12 : i1 to i32
    %c0_i32_10 = arith.constant 0 : i32
    %14 = arith.cmpi ne, %13, %c0_i32_10 : i32
    scf.if %14 {
      %c0_11 = arith.constant 0 : index
      %c0_12 = arith.constant 0 : index
      %15 = vector.load %arg7[%c0_11, %c0_12] : memref<16x128xf32, #tpu.memory_space<vmem>>, vector<16x128xf32>
      %c0_13 = arith.constant 0 : index
      %c0_14 = arith.constant 0 : index
      %16 = vector.load %arg6[%c0_13, %c0_14] : memref<16x128xf32, #tpu.memory_space<vmem>>, vector<16x128xf32>
      tpu.vector_store %arg6[%c0_13, %c0_14], %15 {strides = array<i32>} : memref<16x128xf32, #tpu.memory_space<vmem>>, vector<16x128xf32>,
    } else {
    }
    return
  }
  func.func @transform_0(%arg0: i32, %arg1: i32, %arg2: i32) -> (i32, i32) {
    %c0_i32 = arith.constant 0 : i32
    return %arg0, %arg2 : i32, i32
  }
  func.func @transform_1(%arg0: i32, %arg1: i32, %arg2: i32) -> (i32, i32) {
    %c0_i32 = arith.constant 0 : i32
    return %arg2, %arg1 : i32, i32
  }
  func.func @transform_2(%arg0: i32, %arg1: i32, %arg2: i32) -> (i32, i32) {
    %c0_i32 = arith.constant 0 : i32
    %c0_i32_0 = arith.constant 0 : i32
    return %c0_i32, %arg1 : i32, i32
  }
  func.func @transform_3(%arg0: i32, %arg1: i32, %arg2: i32) -> (i32, i32) {
    %c0_i32 = arith.constant 0 : i32
    return %arg0, %arg1 : i32, i32
  }
}

</mosaic_0001>

<llo_original>
// kernel: tpu_custom_call.1
$region0: #{tpu_custom_call.1}
  #allocation0 [shape = 'u32[]', space=smem, size = 0x4, offset = 0x4, fixed_abs, tag = 'smem constant byte address 0x4 - core index']
  #allocation1 [shape = 'u32[144,128]{1,0:T(1,128)}', space=vmem, size = 0x12000, scoped, tag = 'internal scratch']
  #allocation2 [shape = 'f32[16,128]{1,0:T(8,128)}', space=vmem, size = 0x2000, scoped, tag = 'scratch operand']
  %s0 = inlined_call_operand.hbm [shape: f32[16,128], index: 0, kind: input, shape index: {}]
  %s1 = inlined_call_operand.hbm [shape: f32[128,128], index: 1, kind: input, shape index: {}]
  %s2 = inlined_call_operand.vmem [shape: f32[1,128], index: 2, kind: input, shape index: {}]
  %s3 = inlined_call_operand.hbm [shape: f32[16,128], index: 3, kind: output, shape index: {}]
  %s4 = sld [smem:[#allocation0]]
  $region42: #{tpu_custom_call.1} parent=0
    _
  %s6 = ssub.s32 1, %s4
  %s7 = scalar_select 0, %s6, %s4
  $region1: #{tpu_custom_call.1} parent=0
    #allocation3 [shape = 'u8[8192]{0}', space=vmem, size = 0x2000, scoped, tag = 'input window, operand 0, single buffered']
    #allocation4 [shape = 's32[1]{0}', space=sflag, size = 0x4, scoped, tag = 'scoped memory for tpu_custom_call.1']
    #allocation5 [shape = 's32[1]{0}', space=sflag, size = 0x4, scoped, tag = 'scoped memory for tpu_custom_call.1']
    #allocation6 [shape = 'u8[65536]{0}', space=vmem, size = 0x10000, scoped, tag = 'input window, operand 1, single buffered']
    #allocation7 [shape = 's32[1]{0}', space=sflag, size = 0x4, scoped, tag = 'scoped memory for tpu_custom_call.1']
    #allocation8 [shape = 'u8[8192]{0}', space=vmem, size = 0x2000, scoped, tag = 'output window, operand 0, single buffered']
    %8 = vsyncpa [#allocation4], 0
    %9 = vsyncpa [#allocation7], 0
    %10 = vsyncpa [#allocation5], 0
    // Predicated region
    $region2: #{tpu_custom_call.1} parent=1 // pred_check
      _
    $region3: #{tpu_custom_call.1} parent=1 // pred_check_branch
      %12 = sbr.rel (0) target = $region5
    $region4: #{tpu_custom_call.1} parent=1 // pred_region
      %s14 = ssub.s32 256, 256
      %15 = vsyncadd [#allocation4], %s14
      %s16 = sshll.u32 [#allocation3], 4
      %s17 = int_to_ptr.vmem [resolvable:$true] %s16
      %22 = dma.hbm_to_vmem [thread:$0]  %s0, 256, %s17, [#allocation4], 128, 128, 8
    $region5: #{tpu_custom_call.1} parent=1 // pred_fallthru
      _
    // Predicated region
    $region6: #{tpu_custom_call.1} parent=1 // pred_check
      _
    $region7: #{tpu_custom_call.1} parent=1 // pred_check_branch
      %24 = sbr.rel (0) target = $region9
    $region8: #{tpu_custom_call.1} parent=1 // pred_region
      %s26 = ssub.s32 2048, 2048
      %27 = vsyncadd [#allocation7], %s26
      %s28 = sshll.u32 [#allocation6], 4
      %s29 = int_to_ptr.vmem [resolvable:$true] %s28
      %34 = dma.hbm_to_vmem [thread:$0]  %s1, 2048, %s29, [#allocation7], 128, 128, 8
    $region9: #{tpu_custom_call.1} parent=1 // pred_fallthru
      _
    // Predicated region
    $region10: #{tpu_custom_call.1} parent=1 // pred_check
      _
    $region11: #{tpu_custom_call.1} parent=1 // pred_check_branch
      %36 = sbr.rel (0) target = $region13
    $region12: #{tpu_custom_call.1} parent=1 // pred_region
      _
    $region13: #{tpu_custom_call.1} parent=1 // pred_fallthru
      _
    // Predicated region
    $region14: #{tpu_custom_call.1} parent=1 // pred_check
      _
    $region15: #{tpu_custom_call.1} parent=1 // pred_check_branch
      %38 = sbr.rel (0) target = $region17
    $region16: #{tpu_custom_call.1} parent=1 // pred_region
      %39 = dma.done [#allocation4], 256
    $region17: #{tpu_custom_call.1} parent=1 // pred_fallthru
      _
    // Predicated region
    $region18: #{tpu_custom_call.1} parent=1 // pred_check
      _
    $region19: #{tpu_custom_call.1} parent=1 // pred_check_branch
      %41 = sbr.rel (0) target = $region21
    $region20: #{tpu_custom_call.1} parent=1 // pred_region
      %42 = dma.done [#allocation7], 2048
    $region21: #{tpu_custom_call.1} parent=1 // pred_fallthru
      _
    %p43 = scmp.eq.s32.totalorder 0, 0
    // Predicated region
    $region22: #{tpu_custom_call.1} parent=1 // pred_check
      %p44 = pneg %p43
    $region23: #{tpu_custom_call.1} parent=1 // pred_check_branch
      %46 = sbr.rel (%p44) target = $region25
    $region24: #{tpu_custom_call.1} parent=1 // pred_region
      %v47 = vld [vmem:[%s2] sm:$0x1]
      %v49 = vlaneseq
      %v50 = vshrl.u32 %v49, 7
      %v51 = vsub.s32 0, %v50
      %v52 = vrot.slane %v47, %v51
      %54 = vst [vmem:[#allocation2] sm:$0xff] %v52
      %55 = vst [vmem:[#allocation2 + $0x8] sm:$0xff] %v52
    $region25: #{tpu_custom_call.1} parent=1 // pred_fallthru
      _
    %v56 = vld [vmem:[#allocation2] sm:$0xff]
    %v57 = vld [vmem:[#allocation2 + $0x8] sm:$0xff]
    %v58 = vld [vmem:[#allocation3] sm:$0xff]
    %v59 = vld [vmem:[#allocation3 + $0x8] sm:$0xff]
    %v60 = vld [vmem:[#allocation6] sm:$0xff]
    %v61 = vld [vmem:[#allocation6 + $0x8] sm:$0xff]
    %v62 = vld [vmem:[#allocation6 + $0x10] sm:$0xff]
    %v63 = vld [vmem:[#allocation6 + $0x18] sm:$0xff]
    %v64 = vld [vmem:[#allocation6 + $0x20] sm:$0xff]
    %v65 = vld [vmem:[#allocation6 + $0x28] sm:$0xff]
    %v66 = vld [vmem:[#allocation6 + $0x30] sm:$0xff]
    %v67 = vld [vmem:[#allocation6 + $0x38] sm:$0xff]
    %v68 = vld [vmem:[#allocation6 + $0x40] sm:$0xff]
    %v69 = vld [vmem:[#allocation6 + $0x48] sm:$0xff]
    %v70 = vld [vmem:[#allocation6 + $0x50] sm:$0xff]
    %v71 = vld [vmem:[#allocation6 + $0x58] sm:$0xff]
    %v72 = vld [vmem:[#allocation6 + $0x60] sm:$0xff]
    %v73 = vld [vmem:[#allocation6 + $0x68] sm:$0xff]
    %v74 = vld [vmem:[#allocation6 + $0x70] sm:$0xff]
    %v75 = vld [vmem:[#allocation6 + $0x78] sm:$0xff]
    %76 = vmatprep.subr.mxu0 0.0
    %77 = vmatpush1.msra.mxu0 %v60
    %78 = vmatprep.subr.mxu0 0.0
    %79 = vmatpush1.msra.mxu0 %v61
    %80 = vmatprep.subr.mxu0 0.0
    %81 = vmatpush1.msra.mxu0 %v62
    %82 = vmatprep.subr.mxu0 0.0
    %83 = vmatpush1.msra.mxu0 %v63
    %84 = vmatprep.subr.mxu0 0.0
    %85 = vmatpush1.msra.mxu0 %v64
    %86 = vmatprep.subr.mxu0 0.0
    %87 = vmatpush1.msra.mxu0 %v65
    %88 = vmatprep.subr.mxu0 0.0
    %89 = vmatpush1.msra.mxu0 %v66
    %90 = vmatprep.subr.mxu0 0.0
    %91 = vmatpush1.msra.mxu0 %v67
    %92 = vmatprep.subr.mxu0 0.0
    %93 = vmatpush1.msra.mxu0 %v68
    %94 = vmatprep.subr.mxu0 0.0
    %95 = vmatpush1.msra.mxu0 %v69
    %96 = vmatprep.subr.mxu0 0.0
    %97 = vmatpush1.msra.mxu0 %v70
    %98 = vmatprep.subr.mxu0 0.0
    %99 = vmatpush1.msra.mxu0 %v71
    %100 = vmatprep.subr.mxu0 0.0
    %101 = vmatpush1.msra.mxu0 %v72
    %102 = vmatprep.subr.mxu0 0.0
    %103 = vmatpush1.msra.mxu0 %v73
    %104 = vmatprep.subr.mxu0 0.0
    %105 = vmatpush1.msra.mxu0 %v74
    %106 = vmatprep.subr.mxu0 0.0
    %107 = vmatpush1.msra.mxu0 %v75
    %108 = vmatprep.subr.mxu0 0.0
    %109 = vmatpush1.msra.mxu0 0.0
    %110 = vmatprep.subr.mxu0 0.0
    %111 = vmatpush1.msra.mxu0 0.0
    %112 = vmatprep.subr.mxu0 0.0
    %113 = vmatpush1.msra.mxu0 0.0
    %114 = vmatprep.subr.mxu0 0.0
    %115 = vmatpush1.msra.mxu0 0.0
    %116 = vmatprep.subr.mxu0 0.0
    %117 = vmatpush1.msra.mxu0 0.0
    %118 = vmatprep.subr.mxu0 0.0
    %119 = vmatpush1.msra.mxu0 0.0
    %120 = vmatprep.subr.mxu0 0.0
    %121 = vmatpush1.msra.mxu0 0.0
    %122 = vmatprep.subr.mxu0 0.0
    %123 = vmatpush1.msra.mxu0 0.0
    %124 = vmatprep.subr.mxu0 0.0
    %125 = vmatpush1.msra.mxu0 0.0
    %126 = vmatprep.subr.mxu0 0.0
    %127 = vmatpush1.msra.mxu0 0.0
    %128 = vmatprep.subr.mxu0 0.0
    %129 = vmatpush1.msra.mxu0 0.0
    %130 = vmatprep.subr.mxu0 0.0
    %131 = vmatpush1.msra.mxu0 0.0
    %132 = vmatprep.subr.mxu0 0.0
    %133 = vmatpush1.msra.mxu0 0.0
    %134 = vmatprep.subr.mxu0 0.0
    %135 = vmatpush1.msra.mxu0 0.0
    %136 = vmatprep.subr.mxu0 0.0
    %137 = vmatpush1.msra.mxu0 0.0
    %138 = vmatprep.subr.mxu0 0.0
    %139 = vmatpush1.msra.mxu0 0.0
    %140 = vmatprep.mubr.f32.mxu0 0.0
    %141 = vmatmul.mubr.f32.gmra.mrb[0].mxu0 %v58
    %v142 = vpop.f32.mrb[0].mxu0
    %v143 = vadd.f32 0.0, %v142
    %v144 = vpop.f32.mrb[0].mxu0
    %145 = vmatprep.mubr.f32.mxu0 0.0
    %146 = vmatmul.mubr.f32.gmra.mrb[0].mxu0 %v59
    %v147 = vpop.f32.mrb[0].mxu0
    %v148 = vadd.f32 0.0, %v147
    %v149 = vpop.f32.mrb[0].mxu0
    %150 = vdwg.mxu0
    %v151 = vadd.f32 %v56, %v143
    %v152 = vadd.f32 %v57, %v148
    %153 = vst [vmem:[#allocation2] sm:$0xff] %v151
    %154 = vst [vmem:[#allocation2 + $0x8] sm:$0xff] %v152
    %p155 = scmp.eq.s32.totalorder 0, 0
    // Predicated region
    $region26: #{tpu_custom_call.1} parent=1 // pred_check
      %p156 = pneg %p155
    $region27: #{tpu_custom_call.1} parent=1 // pred_check_branch
      %158 = sbr.rel (%p156) target = $region29
    $region28: #{tpu_custom_call.1} parent=1 // pred_region
      %v159 = vld [vmem:[#allocation2] sm:$0xff]
      %v160 = vld [vmem:[#allocation2 + $0x8] sm:$0xff]
      %v161 = vld [vmem:[#allocation3] sm:$0xff]
      %v162 = vld [vmem:[#allocation3 + $0x8] sm:$0xff]
      %v163 = vadd.f32 %v159, %v161
      %v164 = vadd.f32 %v160, %v162
      %165 = vst [vmem:[#allocation2] sm:$0xff] %v163
      %166 = vst [vmem:[#allocation2 + $0x8] sm:$0xff] %v164
    $region29: #{tpu_custom_call.1} parent=1 // pred_fallthru
      _
    // Predicated region
    $region30: #{tpu_custom_call.1} parent=1 // pred_check
      %p167 = pneg %p43
    $region31: #{tpu_custom_call.1} parent=1 // pred_check_branch
      %169 = sbr.rel (%p167) target = $region33
    $region32: #{tpu_custom_call.1} parent=1 // pred_region
      %v170 = vld [vmem:[#allocation2] sm:$0xff]
      %v171 = vld [vmem:[#allocation2 + $0x8] sm:$0xff]
      %172 = vst [vmem:[#allocation8] sm:$0xff] %v170
      %173 = vst [vmem:[#allocation8 + $0x8] sm:$0xff] %v171
    $region33: #{tpu_custom_call.1} parent=1 // pred_fallthru
      _
    // Predicated region
    $region34: #{tpu_custom_call.1} parent=1 // pred_check
      _
    $region35: #{tpu_custom_call.1} parent=1 // pred_check_branch
      %175 = sbr.rel (0) target = $region37
    $region36: #{tpu_custom_call.1} parent=1 // pred_region
      %s177 = ssub.s32 256, 256
      %178 = vsyncadd [#allocation5], %s177
      %s179 = sshll.u32 [#allocation8], 4
      %s180 = int_to_ptr.vmem [resolvable:$true] %s179
      %185 = dma.vmem_to_hbm [thread:$0]  %s180, 256, %s3, [#allocation5], 128, 128, 8
    $region37: #{tpu_custom_call.1} parent=1 // pred_fallthru
      _
    // Predicated region
    $region38: #{tpu_custom_call.1} parent=1 // pred_check
      _
    $region39: #{tpu_custom_call.1} parent=1 // pred_check_branch
      %187 = sbr.rel (0) target = $region41
    $region40: #{tpu_custom_call.1} parent=1 // pred_region
      %188 = dma.done [#allocation5], 256
    $region41: #{tpu_custom_call.1} parent=1 // pred_fallthru
      _
    %189 = vsyncpa [#allocation4], 1
    %190 = vsyncpa [#allocation7], 1
    %191 = vsyncpa [#allocation5], 1

</llo_original>
